<compile_context>
chip_gen: v7x
topology: tpu7x:2x2x1
jax: 0.10.0
libtpu: 0.0.40
codegen_flags: <defaults>
</compile_context>

<pallas_src>
import functools

import jax
import jax.numpy as jnp
from jax.experimental import pallas as pl
from jax.experimental.pallas import tpu as pltpu


_TILE_N_TARGET = 32768           # pixels (lanes) per tile; multiple of 128.
_VMEM_LIMIT_BYTES = 48 * 1024 * 1024   # > v5e 16MiB default, < v7x 64MiB phys.


def _choose_tiling(hw):
    """Returns (tile_n, n_outer, n_inner) with n_outer * n_inner tiles."""
    if hw <= _TILE_N_TARGET:
        return hw, 1, 1
    tile_n = _TILE_N_TARGET                       # multiple of 128
    n_tiles = (hw + tile_n - 1) // tile_n
    n_outer = 2 if n_tiles % 2 == 0 else 1        # megacore-friendly split
    return tile_n, n_outer, n_tiles // n_outer


# ----------------------------------------------------------------------------
# Fused kernel: MXU 1x1 conv + vertex/seg writeback + loss partials.
# ----------------------------------------------------------------------------
def _fused_kernel(x_ref, vg_ref, m_ref, w_ref, b_ref,
                  vert_ref, seg_ref, acc_ref,
                  sl1_acc, misc_acc, *, hw, has_partial):
    go = pl.program_id(1)
    gi = pl.program_id(2)
    n_inner = pl.num_programs(2)
    dv, tile_n = vg_ref.shape

    # ---- the "net": 1x1 conv on the MXU, all Cout rows at once -------------
    out = jnp.dot(w_ref[...], x_ref[...], preferred_element_type=jnp.float32)
    out = out + b_ref[...]                           # (Cout, T) f32
    vert = out[0:dv, :]                              # (Dv, T)
    seg = out[dv:dv + 2, :]                          # (2,  T)
    vert_ref[...] = vert.astype(vert_ref.dtype)
    seg_ref[...] = seg.astype(seg_ref.dtype)

    # ---- per-pixel loss terms ----------------------------------------------
    w = m_ref[...].astype(jnp.float32)               # (1, T) mask {0,1}

    # masked smooth-L1 (beta = 1.0):  smooth_l1(pred*w, gt*w, reduction='sum')
    d = (vert - vg_ref[...]) * w                     # (Dv, T)
    ad = jnp.abs(d)
    sl1 = jnp.where(ad < 1.0, 0.5 * d * d, ad - 0.5)

    # 2-class cross entropy: lse = max + log(1 + exp(-|l0-l1|))  (2 EUP ops/px)
    l0 = seg[0:1, :]
    l1 = seg[1:2, :]
    lse = jnp.maximum(l0, l1) + jnp.log(1.0 + jnp.exp(-jnp.abs(l0 - l1)))
    tgt = jnp.where(w > 0.5, l1, l0)                 # mask is the class id
    ce = lse - tgt

    if has_partial:
        # Only emitted when hw % tile_n != 0: lanes past HW on the (single)
        # partial tile must not contribute.  Keep jnp.where (not a multiply):
        # padded vg/mask lanes may hold arbitrary bit patterns (NaN-safe).
        lane = jax.lax.broadcasted_iota(jnp.int32, (1, tile_n), 1)
        valid = ((go * n_inner + gi) * tile_n + lane) < hw
        sl1 = jnp.where(valid, sl1, 0.0)
        ce = jnp.where(valid, ce, 0.0)
        w = jnp.where(valid, w, 0.0)

    # ---- VALU vector accumulators in scratch; one XLU reduce per chunk ------
    @pl.when(gi == 0)
    def _():
        sl1_acc[...] = jnp.zeros_like(sl1_acc)
        misc_acc[...] = jnp.zeros_like(misc_acc)

    sl1_acc[...] += sl1
    misc_acc[0:1, :] += w
    misc_acc[1:2, :] += ce

    @pl.when(gi == n_inner - 1)
    def _():
        sl1_sum = jnp.sum(sl1_acc[...])
        m_sum = jnp.sum(misc_acc[0:1, :])
        ce_sum = jnp.sum(misc_acc[1:2, :])
        # Fuse the three partials into a single (1, 3) output block.
        lane3 = jax.lax.broadcasted_iota(jnp.int32, (1, 3), 1)
        acc_ref[...] = jnp.where(lane3 == 0, sl1_sum,
                                 jnp.where(lane3 == 1, m_sum, ce_sum))


# ----------------------------------------------------------------------------
# Conv-only kernel (used by the 'pose_test' branch: no losses needed).
# ----------------------------------------------------------------------------
def _conv_only_kernel(x_ref, w_ref, b_ref, vert_ref, seg_ref):
    dv = vert_ref.shape[0]
    out = jnp.dot(w_ref[...], x_ref[...], preferred_element_type=jnp.float32)
    out = out + b_ref[...]
    vert_ref[...] = out[0:dv, :].astype(vert_ref.dtype)
    seg_ref[...] = out[dv:dv + 2, :].astype(seg_ref.dtype)


# ----------------------------------------------------------------------------
# pallas_call wrappers
# ----------------------------------------------------------------------------
def _fused_forward(x, vg, mask, w, b, dv, hw, tile_n, n_outer, n_inner):
    B, cin, _ = x.shape
    cout = dv + 2
    grid = (B, n_outer, n_inner)
    has_partial = (hw % tile_n) != 0

    tile_map = lambda bi, go, gi: (bi, 0, go * n_inner + gi)
    const_map = lambda bi, go, gi: (0, 0)
    acc_map = lambda bi, go, gi: (bi, go, 0, 0)

    n_px = B * hw
    cost = pl.CostEstimate(
        flops=2 * n_px * cin * cout + n_px * (6 * dv + 16),
        transcendentals=2 * n_px,
        bytes_accessed=n_px * (4 * cin + 8 * dv + 9),
    )

    return pl.pallas_call(
        functools.partial(_fused_kernel, hw=hw, has_partial=has_partial),
        out_shape=(
            jax.ShapeDtypeStruct((B, dv, hw), x.dtype),          # vertex
            jax.ShapeDtypeStruct((B, 2, hw), x.dtype),           # seg logits
            jax.ShapeDtypeStruct((B, n_outer, 1, 3), jnp.float32),  # partials
        ),
        grid=grid,
        in_specs=[
            pl.BlockSpec((None, cin, tile_n), tile_map),         # inp
            pl.BlockSpec((None, dv, tile_n), tile_map),          # vertex gt
            pl.BlockSpec((None, 1, tile_n), tile_map),           # mask (int8)
            pl.BlockSpec((cout, cin), const_map),                # conv weight
            pl.BlockSpec((cout, 1), const_map),                  # conv bias
        ],
        out_specs=(
            pl.BlockSpec((None, dv, tile_n), tile_map),
            pl.BlockSpec((None, 2, tile_n), tile_map),
            pl.BlockSpec((None, None, 1, 3), acc_map),
        ),
        scratch_shapes=[
            pltpu.VMEM((dv, tile_n), jnp.float32),               # smooth-L1 acc
            pltpu.VMEM((2, tile_n), jnp.float32),                # [mask, CE] acc
        ],
        compiler_params=pltpu.CompilerParams(
            dimension_semantics=("parallel", "parallel", "arbitrary"),
            vmem_limit_bytes=_VMEM_LIMIT_BYTES),
        cost_estimate=cost,
    )(x, vg, mask, w, b)


def _conv_only_forward(x, w, b, dv, hw, tile_n):
    B, cin, _ = x.shape
    cout = dv + 2
    n_tiles = (hw + tile_n - 1) // tile_n
    grid = (B, n_tiles)
    tile_map = lambda bi, ti: (bi, 0, ti)
    const_map = lambda bi, ti: (0, 0)
    return pl.pallas_call(
        _conv_only_kernel,
        out_shape=(jax.ShapeDtypeStruct((B, dv, hw), x.dtype),
                   jax.ShapeDtypeStruct((B, 2, hw), x.dtype)),
        grid=grid,
        in_specs=[pl.BlockSpec((None, cin, tile_n), tile_map),
                  pl.BlockSpec((cout, cin), const_map),
                  pl.BlockSpec((cout, 1), const_map)],
        out_specs=(pl.BlockSpec((None, dv, tile_n), tile_map),
                   pl.BlockSpec((None, 2, tile_n), tile_map)),
        compiler_params=pltpu.CompilerParams(
            dimension_semantics=("parallel", "parallel"),
            vmem_limit_bytes=_VMEM_LIMIT_BYTES),
    )(x, w, b)


# ----------------------------------------------------------------------------
# NetworkWrapper.forward equivalent.
# ----------------------------------------------------------------------------
def network_wrapper_forward(batch, params, vn, tile_n=None):
    inp = batch["inp"]                               # (B, Cin, H, W) NCHW
    B, cin, H, W = inp.shape
    hw = H * W
    dv = 2 * vn
    cout = dv + 2

    if tile_n is None:
        tile_n, n_outer, n_inner = _choose_tiling(hw)
    else:
        n_tiles = (hw + tile_n - 1) // tile_n
        n_outer = 2 if (n_tiles >= 2 and n_tiles % 2 == 0) else 1
        n_inner = n_tiles // n_outer

    # Free reshapes: stay channel-major, pixels land on the lane axis.
    x = inp.reshape(B, cin, hw)
    w = params["w"].reshape(cout, cin)               # conv weight (Cout,Cin,1,1)
    b = params["b"].reshape(cout, 1)

    if "pose_test" in batch["meta"]:
        vert, seg = _conv_only_forward(x, w, b, dv, hw, tile_n)
        output = {"vertex": vert.reshape(B, dv, H, W),
                  "seg": seg.reshape(B, 2, H, W)}
        return output, jnp.array(0, dtype=jnp.int32), {}, {}

    vg = batch["vertex"].reshape(B, dv, hw)
    # Mask streamed as int8: 1 B/px instead of 4 (values are {0,1}).
    mask = batch["mask"].astype(jnp.int8).reshape(B, 1, hw)

    vert, seg, acc = _fused_forward(x, vg, mask, w, b, dv, hw,
                                    tile_n, n_outer, n_inner)

    output = {"vertex": vert.reshape(B, dv, H, W),
              "seg": seg.reshape(B, 2, H, W)}

    sl1_sum = jnp.sum(acc[..., 0])
    mask_sum = jnp.sum(acc[..., 1])
    ce_sum = jnp.sum(acc[..., 2])

    # NOTE: like the PyTorch reference, no guard on mask_sum == 0 (both would
    # produce inf/NaN for an all-zero mask).
    vote_loss = sl1_sum / mask_sum / dv
    seg_loss = ce_sum / (B * hw)                     # CrossEntropyLoss 'mean'
    loss = vote_loss + seg_loss

    scalar_stats = {"vote_loss": vote_loss, "seg_loss": seg_loss, "loss": loss}
    image_stats = {}
    return output, loss, scalar_stats, image_stats


# ----------------------------------------------------------------------------
# Driver
# ----------------------------------------------------------------------------
if __name__ == "__main__":
    B, Cin, H, W = 2, 4, 16, 16
    vn = 4                       # keypoints -> vertex head has 2*vn channels
    Dv = 2 * vn
    Cout = Dv + 2

    key = jax.random.PRNGKey(0)
    k_w, k_b, k_x, k_v, k_m = jax.random.split(key, 5)

    # Deterministic synthetic "net" params (1x1 conv, torch Conv2d layout).
    # TODO(synk): real PVNet backbone (ResNet18 + upsampling) not implemented;
    # a 1x1 conv stands in for self.net.
    params = {
        "w": jax.random.normal(k_w, (Cout, Cin, 1, 1), jnp.float32) * 0.1,
        "b": jax.random.normal(k_b, (Cout,), jnp.float32) * 0.1,
    }

    batch = {
        "inp": jax.random.normal(k_x, (B, Cin, H, W), jnp.float32),
        "vertex": jax.random.normal(k_v, (B, Dv, H, W), jnp.float32),
        "mask": (jax.random.uniform(k_m, (B, H, W)) > 0.5).astype(jnp.int32),
        "meta": {},              # no 'pose_test' -> compute losses
    }

    output, loss, scalar_stats, image_stats = network_wrapper_forward(
        batch, params, vn)
    jax.block_until_ready(loss)
    jax.block_until_ready(output["vertex"])
    jax.block_until_ready(output["seg"])

    # ---- lightweight pure-JAX reference check --------------------------------
    w2 = params["w"].reshape(Cout, Cin)
    out_ref = (jnp.einsum("oc,bchw->bohw", w2, batch["inp"])
               + params["b"][None, :, None, None])
    vert_r, seg_r = out_ref[:, :Dv], out_ref[:, Dv:]
    wt = batch["mask"][:, None].astype(jnp.float32)
    d = (vert_r - batch["vertex"]) * wt
    ad = jnp.abs(d)
    sl1_r = jnp.sum(jnp.where(ad < 1.0, 0.5 * d * d, ad - 0.5))
    vote_r = sl1_r / jnp.sum(wt) / Dv
    mx = jnp.maximum(seg_r[:, 0], seg_r[:, 1])
    lse = mx + jnp.log(jnp.exp(seg_r[:, 0] - mx) + jnp.exp(seg_r[:, 1] - mx))
    tgt = jnp.where(batch["mask"] > 0, seg_r[:, 1], seg_r[:, 0])
    seg_loss_r = jnp.mean(lse - tgt)
    loss_r = vote_r + seg_loss_r

    assert jnp.allclose(output["vertex"], vert_r, rtol=1e-4, atol=1e-4)
    assert jnp.allclose(output["seg"], seg_r, rtol=1e-4, atol=1e-4)
    assert jnp.allclose(loss, loss_r, rtol=1e-3, atol=1e-3)

    print("KERNEL_OK")
</pallas_src>

<mosaic_0001>
module attributes {stable_mosaic.version = 11 : i64} {
  func.func @_fused_kernel(%arg0: i32, %arg1: i32, %arg2: i32, %arg3: memref<1x4x256xf32, #tpu.memory_space<vmem>>, %arg4: memref<1x8x256xf32, #tpu.memory_space<vmem>>, %arg5: memref<1x1x256xi8, #tpu.memory_space<vmem>>, %arg6: memref<10x4xf32, #tpu.memory_space<vmem>>, %arg7: memref<10x1xf32, #tpu.memory_space<vmem>>, %arg8: memref<1x8x256xf32, #tpu.memory_space<vmem>>, %arg9: memref<1x2x256xf32, #tpu.memory_space<vmem>>, %arg10: memref<1x1x1x3xf32, #tpu.memory_space<vmem>>, %arg11: memref<8x256xf32, #tpu.memory_space<vmem>>, %arg12: memref<2x256xf32, #tpu.memory_space<vmem>>) attributes {dimension_semantics = [#tpu.dimension_semantics<parallel>, #tpu.dimension_semantics<parallel>, #tpu.dimension_semantics<arbitrary>], iteration_bounds = array<i64: 2, 1, 1>, scalar_prefetch = 0 : i64, scratch_operands = 2 : i64, tpu.core_type = #tpu.core_type<tc>, window_params = [{transform_indices = @transform_0, window_bounds = array<i64: 1, 4, 256>}, {transform_indices = @transform_1, window_bounds = array<i64: 1, 8, 256>}, {transform_indices = @transform_2, window_bounds = array<i64: 1, 1, 256>}, {pipeline_mode = #tpu.pipeline_mode<synchronous>, transform_indices = @transform_3, window_bounds = array<i64: 10, 4>}, {pipeline_mode = #tpu.pipeline_mode<synchronous>, transform_indices = @transform_4, window_bounds = array<i64: 10, 1>}, {transform_indices = @transform_5, window_bounds = array<i64: 1, 8, 256>}, {transform_indices = @transform_6, window_bounds = array<i64: 1, 2, 256>}, {transform_indices = @transform_7, window_bounds = array<i64: 1, 1, 1, 3>}]} {
    %c0 = arith.constant 0 : index
    %c0_0 = arith.constant 0 : index
    %0 = vector.load %arg6[%c0, %c0_0] : memref<10x4xf32, #tpu.memory_space<vmem>>, vector<10x4xf32>
    %c0_1 = arith.constant 0 : index
    %c0_2 = arith.constant 0 : index
    %c0_3 = arith.constant 0 : index
    %1 = vector.load %arg3[%c0_1, %c0_2, %c0_3] : memref<1x4x256xf32, #tpu.memory_space<vmem>>, vector<1x4x256xf32>
    %2 = vector.shape_cast %1 : vector<1x4x256xf32> to vector<4x256xf32>
    %cst = arith.constant dense<0.000000e+00> : vector<10x256xf32>
    %3 = tpu.matmul %0, %2, %cst {dimension_numbers = #tpu.dot_dimension_numbers<[1], [0], [0], [1], [0, 0, 1, 1], [], []>} : vector<10x4xf32>, vector<4x256xf32>, vector<10x256xf32> -> vector<10x256xf32>
    %c0_4 = arith.constant 0 : index
    %c0_5 = arith.constant 0 : index
    %4 = vector.load %arg7[%c0_4, %c0_5] : memref<10x1xf32, #tpu.memory_space<vmem>>, vector<10x1xf32>
    %5 = vector.broadcast %4 : vector<10x1xf32> to vector<10x256xf32>
    %6 = arith.addf %3, %5 : vector<10x256xf32>
    %7 = vector.extract_strided_slice %6 {offsets = [0, 0], sizes = [8, 256], strides = [1, 1]} : vector<10x256xf32> to vector<8x256xf32>
    %8 = vector.extract_strided_slice %6 {offsets = [8, 0], sizes = [2, 256], strides = [1, 1]} : vector<10x256xf32> to vector<2x256xf32>
    %c0_6 = arith.constant 0 : index
    %c0_7 = arith.constant 0 : index
    %c0_8 = arith.constant 0 : index
    %9 = vector.load %arg8[%c0_6, %c0_7, %c0_8] : memref<1x8x256xf32, #tpu.memory_space<vmem>>, vector<1x8x256xf32>
    %10 = vector.shape_cast %9 : vector<1x8x256xf32> to vector<8x256xf32>
    %11 = vector.shape_cast %7 : vector<8x256xf32> to vector<1x8x256xf32>
    tpu.vector_store %arg8[%c0_6, %c0_7, %c0_8], %11 {strides = array<i32>} : memref<1x8x256xf32, #tpu.memory_space<vmem>>, vector<1x8x256xf32>,
    %c0_9 = arith.constant 0 : index
    %c0_10 = arith.constant 0 : index
    %c0_11 = arith.constant 0 : index
    %12 = vector.load %arg9[%c0_9, %c0_10, %c0_11] : memref<1x2x256xf32, #tpu.memory_space<vmem>>, vector<1x2x256xf32>
    %13 = vector.shape_cast %12 : vector<1x2x256xf32> to vector<2x256xf32>
    %14 = vector.shape_cast %8 : vector<2x256xf32> to vector<1x2x256xf32>
    tpu.vector_store %arg9[%c0_9, %c0_10, %c0_11], %14 {strides = array<i32>} : memref<1x2x256xf32, #tpu.memory_space<vmem>>, vector<1x2x256xf32>,
    %c0_12 = arith.constant 0 : index
    %c0_13 = arith.constant 0 : index
    %c0_14 = arith.constant 0 : index
    %15 = vector.load %arg5[%c0_12, %c0_13, %c0_14] : memref<1x1x256xi8, #tpu.memory_space<vmem>>, vector<1x1x256xi8>
    %16 = vector.shape_cast %15 : vector<1x1x256xi8> to vector<1x256xi8>
    %17 = arith.sitofp %16 : vector<1x256xi8> to vector<1x256xf32>
    %c0_15 = arith.constant 0 : index
    %c0_16 = arith.constant 0 : index
    %c0_17 = arith.constant 0 : index
    %18 = vector.load %arg4[%c0_15, %c0_16, %c0_17] : memref<1x8x256xf32, #tpu.memory_space<vmem>>, vector<1x8x256xf32>
    %19 = vector.shape_cast %18 : vector<1x8x256xf32> to vector<8x256xf32>
    %20 = arith.subf %7, %19 : vector<8x256xf32>
    %21 = vector.broadcast %17 : vector<1x256xf32> to vector<8x256xf32>
    %22 = arith.mulf %20, %21 : vector<8x256xf32>
    %23 = math.absf %22 : vector<8x256xf32>
    %cst_18 = arith.constant 1.000000e+00 : f32
    %24 = vector.broadcast %cst_18 : f32 to vector<8x256xf32>
    %25 = arith.cmpf olt, %23, %24 : vector<8x256xf32>
    %cst_19 = arith.constant 5.000000e-01 : f32
    %26 = vector.broadcast %cst_19 : f32 to vector<8x256xf32>
    %27 = arith.mulf %26, %22 : vector<8x256xf32>
    %28 = arith.mulf %27, %22 : vector<8x256xf32>
    %cst_20 = arith.constant 5.000000e-01 : f32
    %29 = vector.broadcast %cst_20 : f32 to vector<8x256xf32>
    %30 = arith.subf %23, %29 : vector<8x256xf32>
    %31 = arith.select %25, %28, %30 : vector<8x256xi1>, vector<8x256xf32>
    %32 = vector.extract_strided_slice %8 {offsets = [0, 0], sizes = [1, 256], strides = [1, 1]} : vector<2x256xf32> to vector<1x256xf32>
    %33 = vector.extract_strided_slice %8 {offsets = [1, 0], sizes = [1, 256], strides = [1, 1]} : vector<2x256xf32> to vector<1x256xf32>
    %34 = arith.maximumf %32, %33 : vector<1x256xf32>
    %35 = arith.subf %32, %33 : vector<1x256xf32>
    %36 = math.absf %35 : vector<1x256xf32>
    %cst_21 = arith.constant 0.000000e+00 : f32
    %37 = vector.broadcast %cst_21 : f32 to vector<1x256xf32>
    %38 = arith.subf %37, %36 : vector<1x256xf32>
    %39 = math.exp %38 : vector<1x256xf32>
    %cst_22 = arith.constant 1.000000e+00 : f32
    %40 = vector.broadcast %cst_22 : f32 to vector<1x256xf32>
    %41 = arith.addf %40, %39 : vector<1x256xf32>
    %42 = math.log %41 : vector<1x256xf32>
    %43 = arith.addf %34, %42 : vector<1x256xf32>
    %cst_23 = arith.constant 5.000000e-01 : f32
    %44 = vector.broadcast %cst_23 : f32 to vector<1x256xf32>
    %45 = arith.cmpf ogt, %17, %44 : vector<1x256xf32>
    %46 = arith.select %45, %33, %32 : vector<1x256xi1>, vector<1x256xf32>
    %47 = arith.subf %43, %46 : vector<1x256xf32>
    %c0_i32 = arith.constant 0 : i32
    %48 = arith.cmpi eq, %arg2, %c0_i32 : i32
    %49 = arith.extui %48 : i1 to i32
    %c0_i32_24 = arith.constant 0 : i32
    %50 = arith.cmpi ne, %49, %c0_i32_24 : i32
    scf.if %50 {
      %cst_38 = arith.constant 0.000000e+00 : f32
      %63 = vector.broadcast %cst_38 : f32 to vector<8x256xf32>
      %c0_39 = arith.constant 0 : index
      %c0_40 = arith.constant 0 : index
      %64 = vector.load %arg11[%c0_39, %c0_40] : memref<8x256xf32, #tpu.memory_space<vmem>>, vector<8x256xf32>
      tpu.vector_store %arg11[%c0_39, %c0_40], %63 {strides = array<i32>} : memref<8x256xf32, #tpu.memory_space<vmem>>, vector<8x256xf32>,
      %cst_41 = arith.constant 0.000000e+00 : f32
      %65 = vector.broadcast %cst_41 : f32 to vector<2x256xf32>
      %c0_42 = arith.constant 0 : index
      %c0_43 = arith.constant 0 : index
      %66 = vector.load %arg12[%c0_42, %c0_43] : memref<2x256xf32, #tpu.memory_space<vmem>>, vector<2x256xf32>
      tpu.vector_store %arg12[%c0_42, %c0_43], %65 {strides = array<i32>} : memref<2x256xf32, #tpu.memory_space<vmem>>, vector<2x256xf32>,
    } else {
    }
    %c0_25 = arith.constant 0 : index
    %c0_26 = arith.constant 0 : index
    %51 = vector.load %arg11[%c0_25, %c0_26] : memref<8x256xf32, #tpu.memory_space<vmem>>, vector<8x256xf32>
    %52 = arith.addf %51, %31 : vector<8x256xf32>
    %c0_27 = arith.constant 0 : index
    %c0_28 = arith.constant 0 : index
    %53 = vector.load %arg11[%c0_27, %c0_28] : memref<8x256xf32, #tpu.memory_space<vmem>>, vector<8x256xf32>
    tpu.vector_store %arg11[%c0_27, %c0_28], %52 {strides = array<i32>} : memref<8x256xf32, #tpu.memory_space<vmem>>, vector<8x256xf32>,
    %c0_29 = arith.constant 0 : index
    %c0_30 = arith.constant 0 : index
    %54 = vector.load %arg12[%c0_29, %c0_30] : memref<2x256xf32, #tpu.memory_space<vmem>>, vector<1x256xf32>
    %55 = arith.addf %54, %17 : vector<1x256xf32>
    %c0_31 = arith.constant 0 : index
    %c0_32 = arith.constant 0 : index
    %56 = vector.load %arg12[%c0_31, %c0_32] : memref<2x256xf32, #tpu.memory_space<vmem>>, vector<1x256xf32>
    tpu.vector_store %arg12[%c0_31, %c0_32], %55 {strides = array<i32>} : memref<2x256xf32, #tpu.memory_space<vmem>>, vector<1x256xf32>,
    %c1 = arith.constant 1 : index
    %c0_33 = arith.constant 0 : index
    %57 = vector.load %arg12[%c1, %c0_33] : memref<2x256xf32, #tpu.memory_space<vmem>>, vector<1x256xf32>
    %58 = arith.addf %57, %47 : vector<1x256xf32>
    %c1_34 = arith.constant 1 : index
    %c0_35 = arith.constant 0 : index
    %59 = vector.load %arg12[%c1_34, %c0_35] : memref<2x256xf32, #tpu.memory_space<vmem>>, vector<1x256xf32>
    tpu.vector_store %arg12[%c1_34, %c0_35], %58 {strides = array<i32>} : memref<2x256xf32, #tpu.memory_space<vmem>>, vector<1x256xf32>,
    %c0_i32_36 = arith.constant 0 : i32
    %60 = arith.cmpi eq, %arg2, %c0_i32_36 : i32
    %61 = arith.extui %60 : i1 to i32
    %c0_i32_37 = arith.constant 0 : i32
    %62 = arith.cmpi ne, %61, %c0_i32_37 : i32
    scf.if %62 {
      %c0_38 = arith.constant 0 : index
      %c0_39 = arith.constant 0 : index
      %63 = vector.load %arg11[%c0_38, %c0_39] : memref<8x256xf32, #tpu.memory_space<vmem>>, vector<8x256xf32>
      %64 = vector.shape_cast %63 : vector<8x256xf32> to vector<1x8x256xf32>
      %cst_40 = arith.constant dense<0.000000e+00> : vector<1xf32>
      %65 = vector.multi_reduction <add>, %64, %cst_40 [1, 2] : vector<1x8x256xf32> to vector<1xf32>
      %66 = vector.shape_cast %65 : vector<1xf32> to vector<1x1x1xf32>
      %67 = vector.extract %66[0, 0, 0] : f32 from vector<1x1x1xf32>
      %c0_41 = arith.constant 0 : index
      %c0_42 = arith.constant 0 : index
      %68 = vector.load %arg12[%c0_41, %c0_42] : memref<2x256xf32, #tpu.memory_space<vmem>>, vector<1x256xf32>
      %69 = vector.shape_cast %68 : vector<1x256xf32> to vector<1x1x256xf32>
      %cst_43 = arith.constant dense<0.000000e+00> : vector<1xf32>
      %70 = vector.multi_reduction <add>, %69, %cst_43 [1, 2] : vector<1x1x256xf32> to vector<1xf32>
      %71 = vector.shape_cast %70 : vector<1xf32> to vector<1x1x1xf32>
      %72 = vector.extract %71[0, 0, 0] : f32 from vector<1x1x1xf32>
      %c1_44 = arith.constant 1 : index
      %c0_45 = arith.constant 0 : index
      %73 = vector.load %arg12[%c1_44, %c0_45] : memref<2x256xf32, #tpu.memory_space<vmem>>, vector<1x256xf32>
      %74 = vector.shape_cast %73 : vector<1x256xf32> to vector<1x1x256xf32>
      %cst_46 = arith.constant dense<0.000000e+00> : vector<1xf32>
      %75 = vector.multi_reduction <add>, %74, %cst_46 [1, 2] : vector<1x1x256xf32> to vector<1xf32>
      %76 = vector.shape_cast %75 : vector<1xf32> to vector<1x1x1xf32>
      %77 = vector.extract %76[0, 0, 0] : f32 from vector<1x1x1xf32>
      %78 = tpu.iota {dimensions = array<i32: 1>} : vector<1x3xi32>
      %c0_i32_47 = arith.constant 0 : i32
      %79 = vector.broadcast %c0_i32_47 : i32 to vector<1x3xi32>
      %80 = arith.cmpi eq, %78, %79 : vector<1x3xi32>
      %c1_i32 = arith.constant 1 : i32
      %81 = vector.broadcast %c1_i32 : i32 to vector<1x3xi32>
      %82 = arith.cmpi eq, %78, %81 : vector<1x3xi32>
      %83 = vector.broadcast %72 : f32 to vector<1x3xf32>
      %84 = vector.broadcast %77 : f32 to vector<1x3xf32>
      %85 = arith.select %82, %83, %84 : vector<1x3xi1>, vector<1x3xf32>
      %86 = vector.broadcast %67 : f32 to vector<1x3xf32>
      %87 = arith.select %80, %86, %85 : vector<1x3xi1>, vector<1x3xf32>
      %c0_48 = arith.constant 0 : index
      %c0_49 = arith.constant 0 : index
      %c0_50 = arith.constant 0 : index
      %c0_51 = arith.constant 0 : index
      %88 = vector.load %arg10[%c0_48, %c0_49, %c0_50, %c0_51] : memref<1x1x1x3xf32, #tpu.memory_space<vmem>>, vector<1x1x1x3xf32>
      %89 = vector.shape_cast %88 : vector<1x1x1x3xf32> to vector<1x3xf32>
      %90 = vector.shape_cast %87 : vector<1x3xf32> to vector<1x1x1x3xf32>
      tpu.vector_store %arg10[%c0_48, %c0_49, %c0_50, %c0_51], %90 {strides = array<i32>} : memref<1x1x1x3xf32, #tpu.memory_space<vmem>>, vector<1x1x1x3xf32>,
    } else {
    }
    return
  }
  func.func @transform_0(%arg0: i32, %arg1: i32, %arg2: i32) -> (i32, i32, i32) {
    %c1_i32 = arith.constant 1 : i32
    %0 = arith.muli %arg1, %c1_i32 : i32
    %1 = arith.addi %0, %arg2 : i32
    %c0_i32 = arith.constant 0 : i32
    %c0_i32_0 = arith.constant 0 : i32
    return %arg0, %c0_i32, %1 : i32, i32, i32
  }
  func.func @transform_1(%arg0: i32, %arg1: i32, %arg2: i32) -> (i32, i32, i32) {
    %c1_i32 = arith.constant 1 : i32
    %0 = arith.muli %arg1, %c1_i32 : i32
    %1 = arith.addi %0, %arg2 : i32
    %c0_i32 = arith.constant 0 : i32
    %c0_i32_0 = arith.constant 0 : i32
    return %arg0, %c0_i32, %1 : i32, i32, i32
  }
  func.func @transform_2(%arg0: i32, %arg1: i32, %arg2: i32) -> (i32, i32, i32) {
    %c1_i32 = arith.constant 1 : i32
    %0 = arith.muli %arg1, %c1_i32 : i32
    %1 = arith.addi %0, %arg2 : i32
    %c0_i32 = arith.constant 0 : i32
    %c0_i32_0 = arith.constant 0 : i32
    return %arg0, %c0_i32, %1 : i32, i32, i32
  }
  func.func @transform_3(%arg0: i32, %arg1: i32, %arg2: i32) -> (i32, i32) {
    %c0_i32 = arith.constant 0 : i32
    %c0_i32_0 = arith.constant 0 : i32
    %c0_i32_1 = arith.constant 0 : i32
    return %c0_i32, %c0_i32_0 : i32, i32
  }
  func.func @transform_4(%arg0: i32, %arg1: i32, %arg2: i32) -> (i32, i32) {
    %c0_i32 = arith.constant 0 : i32
    %c0_i32_0 = arith.constant 0 : i32
    %c0_i32_1 = arith.constant 0 : i32
    return %c0_i32, %c0_i32_0 : i32, i32
  }
  func.func @transform_5(%arg0: i32, %arg1: i32, %arg2: i32) -> (i32, i32, i32) {
    %c1_i32 = arith.constant 1 : i32
    %0 = arith.muli %arg1, %c1_i32 : i32
    %1 = arith.addi %0, %arg2 : i32
    %c0_i32 = arith.constant 0 : i32
    %c0_i32_0 = arith.constant 0 : i32
    return %arg0, %c0_i32, %1 : i32, i32, i32
  }
  func.func @transform_6(%arg0: i32, %arg1: i32, %arg2: i32) -> (i32, i32, i32) {
    %c1_i32 = arith.constant 1 : i32
    %0 = arith.muli %arg1, %c1_i32 : i32
    %1 = arith.addi %0, %arg2 : i32
    %c0_i32 = arith.constant 0 : i32
    %c0_i32_0 = arith.constant 0 : i32
    return %arg0, %c0_i32, %1 : i32, i32, i32
  }
  func.func @transform_7(%arg0: i32, %arg1: i32, %arg2: i32) -> (i32, i32, i32, i32) {
    %c0_i32 = arith.constant 0 : i32
    %c0_i32_0 = arith.constant 0 : i32
    %c0_i32_1 = arith.constant 0 : i32
    return %arg0, %arg1, %c0_i32, %c0_i32_0 : i32, i32, i32, i32
  }
}

</mosaic_0001>

<llo_original>
// kernel: tpu_custom_call.1
$region0: #{tpu_custom_call.1}
  #allocation0 [shape = 'u32[]', space=smem, size = 0x4, offset = 0x4, fixed_abs, tag = 'smem constant byte address 0x4 - core index']
  #allocation1 [shape = 'u32[144,128]{1,0:T(1,128)}', space=vmem, size = 0x12000, scoped, tag = 'internal scratch']
  #allocation2 [shape = 'f32[8,256]{1,0:T(8,128)}', space=vmem, size = 0x2000, scoped, tag = 'scratch operand']
  #allocation3 [shape = 'f32[2,256]{1,0:T(2,128)}', space=vmem, size = 0x800, scoped, tag = 'scratch operand']
  %s0 = inlined_call_operand.hbm [shape: f32[2,4,256], index: 0, kind: input, shape index: {}]
  %s1 = inlined_call_operand.vmem [shape: f32[2,8,256], index: 1, kind: input, shape index: {}]
  %s2 = inlined_call_operand.vmem [shape: s8[2,1,256], index: 2, kind: input, shape index: {}]
  %s3 = inlined_call_operand.vmem [shape: f32[10,4], index: 3, kind: input, shape index: {}]
  %s4 = inlined_call_operand.vmem [shape: f32[10,1], index: 4, kind: input, shape index: {}]
  %s5 = inlined_call_operand.hbm [shape: f32[2,8,256], index: 5, kind: output, shape index: {0}]
  %s6 = inlined_call_operand.hbm [shape: f32[2,2,256], index: 6, kind: output, shape index: {1}]
  %s7 = inlined_call_operand.hbm [shape: f32[2,1,1,3], index: 7, kind: output, shape index: {2}]
  %8 = xla_tuple %s5, %s6, %s7
  %s9 = sld [smem:[#allocation0]]
  $region81: #{tpu_custom_call.1} parent=0
    _
  %s11 = ssub.s32 1, %s9
  %s12 = scalar_select 0, %s11, %s9
  $region1: #{tpu_custom_call.1} parent=0
    #allocation4 [shape = 'u8[8192]{0}', space=vmem, size = 0x2000, scoped, tag = 'input window, operand 0']
    #allocation5 [shape = 's32[2]{0}', space=sflag, size = 0x8, scoped, tag = 'scoped memory for tpu_custom_call.1']
    #allocation6 [shape = 's32[2]{0}', space=sflag, size = 0x8, scoped, tag = 'scoped memory for tpu_custom_call.1']
    #allocation7 [shape = 'u8[16384]{0}', space=vmem, size = 0x4000, scoped, tag = 'output window, operand 0']
    #allocation8 [shape = 'u8[4096]{0}', space=vmem, size = 0x1000, scoped, tag = 'output window, operand 1']
    #allocation9 [shape = 's32[2]{0}', space=sflag, size = 0x8, scoped, tag = 'scoped memory for tpu_custom_call.1']
    #allocation10 [shape = 'u8[1024]{0}', space=vmem, size = 0x400, scoped, tag = 'output window, operand 2']
    %13 = vsyncpa [#allocation5], 0
    %s14 = scalar_lea.sflag [#allocation5], 1
    %15 = vsyncpa %s14, 0
    %16 = vsyncpa [#allocation6], 0
    %s17 = scalar_lea.sflag [#allocation6], 1
    %18 = vsyncpa %s17, 0
    %19 = vsyncpa [#allocation9], 0
    %s20 = scalar_lea.sflag [#allocation9], 1
    %21 = vsyncpa %s20, 0
    loop: start=0, step=1, limit=4
    $region2: #{tpu_custom_call.1} parent=1 // loop_pre_header
      _
    $region3: #{tpu_custom_call.1} parent=1 // loop_header
      %s23 = sphi 0, %s27
      %p24 = scmp.ge.s32.totalorder %s23, 4
      %s30 = sphi 0, %s49
      %s31 = sphi 0, %s45
      %s32 = sphi 0, %s41
      %s33 = sphi 0, %s30
      %s34 = sphi 0, %s31
      %s35 = sphi 0, %s32
      %s36 = sphi 0, %s33
      %s37 = sphi 0, %s34
      %s38 = sphi 0, %s35
      %s56 = sphi 0, %s58
      %s59 = sphi 0, %s56
      %s60 = sphi 0, %s59
      %s76 = sphi 0, %s60
      %s86 = sphi 0, %s88
      %s89 = sphi 0, %s86
      %s90 = sphi 0, %s89
      %s106 = sphi 0, %s90
      %s116 = sphi 0, %s118
      %s119 = sphi 0, %s116
      %s120 = sphi 0, %s119
      %s136 = sphi 0, %s120
      %s140 = sphi 0, %s140
      %s142 = sphi 0, %s140
      %s143 = sphi 0, %s142
      %s157 = sphi 0, %s143
      %s161 = sphi 0, %s161
      %s163 = sphi 0, %s161
      %s164 = sphi 0, %s163
      %s178 = sphi 0, %s164
      %s188 = sphi 0, %s190
      %s191 = sphi 0, %s188
      %s192 = sphi 0, %s191
      %s208 = sphi 0, %s192
      %s218 = sphi 0, %s220
      %s221 = sphi 0, %s218
      %s222 = sphi 0, %s221
      %s238 = sphi 0, %s222
      %s246 = sphi 0, %s248
      %s249 = sphi 0, %s246
      %s250 = sphi 0, %s249
      %s266 = sphi 0, %s250
    $region4: #{tpu_custom_call.1} parent=1 // loop_header_branch
      %26 = sbr.rel (%p24) target = $region8
    $region5: #{tpu_custom_call.1} parent=1 // loop_body
      %s28 = ssub.s32 %s23, 1
      %s29 = ssub.s32 %s23, 2
      %s39 = sadd.s32 1, %s32
      %p40 = scmp.ge.s32.totalorder %s39, 1
      %s41 = scalar_select %p40, 0, %s39
      %s42 = sadd.s32 1, %s31
      %s43 = scalar_select %p40, %s42, %s31
      %p44 = scmp.ge.s32.totalorder %s43, 1
      %s45 = scalar_select %p44, 0, %s43
      %s46 = sadd.s32 1, %s30
      %s47 = scalar_select %p44, %s46, %s30
      %p48 = scmp.ge.s32.totalorder %s47, 2
      %s49 = scalar_select %p48, 0, %s47
      %s50 = sadd.s32 %s31, %s32
      %s51 = sadd.s32 %s45, %s41
      %s52 = ssub.s32 %s30, %s49
      %s53 = ssub.s32 %s50, %s51
      %s54 = sor.u32 %s52, %s53
      %p55 = scmp.eq.s32.totalorder %s54, 0
      %s57 = sadd.s32 %s56, 1
      %s58 = scalar_select %p55, %s56, %s57
      %p61 = pneg %p55
      %p62 = scmp.eq.s32.totalorder %s23, 1
      %p63 = por %p61, %p62
      %p64 = scmp.ne.s32.totalorder %s56, %s59
      %p65 = scmp.eq.s32.totalorder %s23, 0
      %p66 = por %p64, %p65
      %p67 = scmp.ne.s32.totalorder %s56, %s59
      %p68 = scmp.eq.s32.totalorder %s28, 1
      %p69 = por %p67, %p68
      %p70 = scmp.ne.s32.totalorder %s59, %s60
      %p71 = scmp.eq.s32.totalorder %s28, 0
      %p72 = por %p70, %p71
      %p73 = scmp.ne.s32.totalorder %s59, %s60
      %p74 = scmp.eq.s32.totalorder %s29, 1
      %p75 = por %p73, %p74
      %p77 = scmp.ne.s32.totalorder %s60, %s76
      %p78 = scmp.eq.s32.totalorder %s29, 0
      %p79 = por %p77, %p78
      %s80 = sadd.s32 %s31, %s32
      %s81 = sadd.s32 %s45, %s41
      %s82 = ssub.s32 %s30, %s49
      %s83 = ssub.s32 %s80, %s81
      %s84 = sor.u32 %s82, %s83
      %p85 = scmp.eq.s32.totalorder %s84, 0
      %s87 = sadd.s32 %s86, 1
      %s88 = scalar_select %p85, %s86, %s87
      %p91 = pneg %p85
      %p92 = scmp.eq.s32.totalorder %s23, 1
      %p93 = por %p91, %p92
      %p94 = scmp.ne.s32.totalorder %s86, %s89
      %p95 = scmp.eq.s32.totalorder %s23, 0
      %p96 = por %p94, %p95
      %p97 = scmp.ne.s32.totalorder %s86, %s89
      %p98 = scmp.eq.s32.totalorder %s28, 1
      %p99 = por %p97, %p98
      %p100 = scmp.ne.s32.totalorder %s89, %s90
      %p101 = scmp.eq.s32.totalorder %s28, 0
      %p102 = por %p100, %p101
      %p103 = scmp.ne.s32.totalorder %s89, %s90
      %p104 = scmp.eq.s32.totalorder %s29, 1
      %p105 = por %p103, %p104
      %p107 = scmp.ne.s32.totalorder %s90, %s106
      %p108 = scmp.eq.s32.totalorder %s29, 0
      %p109 = por %p107, %p108
      %s110 = sadd.s32 %s31, %s32
      %s111 = sadd.s32 %s45, %s41
      %s112 = ssub.s32 %s30, %s49
      %s113 = ssub.s32 %s110, %s111
      %s114 = sor.u32 %s112, %s113
      %p115 = scmp.eq.s32.totalorder %s114, 0
      %s117 = sadd.s32 %s116, 1
      %s118 = scalar_select %p115, %s116, %s117
      %p121 = pneg %p115
      %p122 = scmp.eq.s32.totalorder %s23, 1
      %p123 = por %p121, %p122
      %p124 = scmp.ne.s32.totalorder %s116, %s119
      %p125 = scmp.eq.s32.totalorder %s23, 0
      %p126 = por %p124, %p125
      %p127 = scmp.ne.s32.totalorder %s116, %s119
      %p128 = scmp.eq.s32.totalorder %s28, 1
      %p129 = por %p127, %p128
      %p130 = scmp.ne.s32.totalorder %s119, %s120
      %p131 = scmp.eq.s32.totalorder %s28, 0
      %p132 = por %p130, %p131
      %p133 = scmp.ne.s32.totalorder %s119, %s120
      %p134 = scmp.eq.s32.totalorder %s29, 1
      %p135 = por %p133, %p134
      %p137 = scmp.ne.s32.totalorder %s120, %s136
      %p138 = scmp.eq.s32.totalorder %s29, 0
      %p139 = por %p137, %p138
      %s141 = sadd.s32 %s140, 1
      %p144 = scmp.eq.s32.totalorder %s23, 1
      %p145 = scmp.ne.s32.totalorder %s140, %s142
      %p146 = scmp.eq.s32.totalorder %s23, 0
      %p147 = por %p145, %p146
      %p148 = scmp.ne.s32.totalorder %s140, %s142
      %p149 = scmp.eq.s32.totalorder %s28, 1
      %p150 = por %p148, %p149
      %p151 = scmp.ne.s32.totalorder %s142, %s143
      %p152 = scmp.eq.s32.totalorder %s28, 0
      %p153 = por %p151, %p152
      %p154 = scmp.ne.s32.totalorder %s142, %s143
      %p155 = scmp.eq.s32.totalorder %s29, 1
      %p156 = por %p154, %p155
      %p158 = scmp.ne.s32.totalorder %s143, %s157
      %p159 = scmp.eq.s32.totalorder %s29, 0
      %p160 = por %p158, %p159
      %s162 = sadd.s32 %s161, 1
      %p165 = scmp.eq.s32.totalorder %s23, 1
      %p166 = scmp.ne.s32.totalorder %s161, %s163
      %p167 = scmp.eq.s32.totalorder %s23, 0
      %p168 = por %p166, %p167
      %p169 = scmp.ne.s32.totalorder %s161, %s163
      %p170 = scmp.eq.s32.totalorder %s28, 1
      %p171 = por %p169, %p170
      %p172 = scmp.ne.s32.totalorder %s163, %s164
      %p173 = scmp.eq.s32.totalorder %s28, 0
      %p174 = por %p172, %p173
      %p175 = scmp.ne.s32.totalorder %s163, %s164
      %p176 = scmp.eq.s32.totalorder %s29, 1
      %p177 = por %p175, %p176
      %p179 = scmp.ne.s32.totalorder %s164, %s178
      %p180 = scmp.eq.s32.totalorder %s29, 0
      %p181 = por %p179, %p180
      %s182 = sadd.s32 %s31, %s32
      %s183 = sadd.s32 %s45, %s41
      %s184 = ssub.s32 %s30, %s49
      %s185 = ssub.s32 %s182, %s183
      %s186 = sor.u32 %s184, %s185
      %p187 = scmp.eq.s32.totalorder %s186, 0
      %s189 = sadd.s32 %s188, 1
      %s190 = scalar_select %p187, %s188, %s189
      %p193 = pneg %p187
      %p194 = scmp.eq.s32.totalorder %s23, 1
      %p195 = por %p193, %p194
      %p196 = scmp.ne.s32.totalorder %s188, %s191
      %p197 = scmp.eq.s32.totalorder %s23, 0
      %p198 = por %p196, %p197
      %p199 = scmp.ne.s32.totalorder %s188, %s191
      %p200 = scmp.eq.s32.totalorder %s28, 1
      %p201 = por %p199, %p200
      %p202 = scmp.ne.s32.totalorder %s191, %s192
      %p203 = scmp.eq.s32.totalorder %s28, 0
      %p204 = por %p202, %p203
      %p205 = scmp.ne.s32.totalorder %s191, %s192
      %p206 = scmp.eq.s32.totalorder %s29, 1
      %p207 = por %p205, %p206
      %p209 = scmp.ne.s32.totalorder %s192, %s208
      %p210 = scmp.eq.s32.totalorder %s29, 0
      %p211 = por %p209, %p210
      %s212 = sadd.s32 %s31, %s32
      %s213 = sadd.s32 %s45, %s41
      %s214 = ssub.s32 %s30, %s49
      %s215 = ssub.s32 %s212, %s213
      %s216 = sor.u32 %s214, %s215
      %p217 = scmp.eq.s32.totalorder %s216, 0
      %s219 = sadd.s32 %s218, 1
      %s220 = scalar_select %p217, %s218, %s219
      %p223 = pneg %p217
      %p224 = scmp.eq.s32.totalorder %s23, 1
      %p225 = por %p223, %p224
      %p226 = scmp.ne.s32.totalorder %s218, %s221
      %p227 = scmp.eq.s32.totalorder %s23, 0
      %p228 = por %p226, %p227
      %p229 = scmp.ne.s32.totalorder %s218, %s221
      %p230 = scmp.eq.s32.totalorder %s28, 1
      %p231 = por %p229, %p230
      %p232 = scmp.ne.s32.totalorder %s221, %s222
      %p233 = scmp.eq.s32.totalorder %s28, 0
      %p234 = por %p232, %p233
      %p235 = scmp.ne.s32.totalorder %s221, %s222
      %p236 = scmp.eq.s32.totalorder %s29, 1
      %p237 = por %p235, %p236
      %p239 = scmp.ne.s32.totalorder %s222, %s238
      %p240 = scmp.eq.s32.totalorder %s29, 0
      %p241 = por %p239, %p240
      %s242 = ssub.s32 %s30, %s49
      %s243 = ssub.s32 %s31, %s45
      %s244 = sor.u32 %s242, %s243
      %p245 = scmp.eq.s32.totalorder %s244, 0
      %s247 = sadd.s32 %s246, 1
      %s248 = scalar_select %p245, %s246, %s247
      %p251 = pneg %p245
      %p252 = scmp.eq.s32.totalorder %s23, 1
      %p253 = por %p251, %p252
      %p254 = scmp.ne.s32.totalorder %s246, %s249
      %p255 = scmp.eq.s32.totalorder %s23, 0
      %p256 = por %p254, %p255
      %p257 = scmp.ne.s32.totalorder %s246, %s249
      %p258 = scmp.eq.s32.totalorder %s28, 1
      %p259 = por %p257, %p258
      %p260 = scmp.ne.s32.totalorder %s249, %s250
      %p261 = scmp.eq.s32.totalorder %s28, 0
      %p262 = por %p260, %p261
      %p263 = scmp.ne.s32.totalorder %s249, %s250
      %p264 = scmp.eq.s32.totalorder %s29, 1
      %p265 = por %p263, %p264
      %p267 = scmp.ne.s32.totalorder %s250, %s266
      %p268 = scmp.eq.s32.totalorder %s29, 0
      %p269 = por %p267, %p268
      %p270 = scmp.le.s32.totalorder 1, %s23
      %p271 = scmp.lt.s32.totalorder %s23, 3
      %p272 = pnand %p270, %p271
      %p273 = pneg %p272
      // Predicated region
      $region9: #{tpu_custom_call.1} parent=5 // pred_check
        _
      $region10: #{tpu_custom_call.1} parent=5 // pred_check_branch
        %275 = sbr.rel (%p272) target = $region12
      $region11: #{tpu_custom_call.1} parent=5 // pred_region
        %s276 = ssub.s32 %s23, 1
        // Predicated region
        $region13: #{tpu_custom_call.1} parent=11 // pred_check
          %p277 = pneg %p153
        $region14: #{tpu_custom_call.1} parent=11 // pred_check_branch
          %279 = sbr.rel (%p277) target = $region16
        $region15: #{tpu_custom_call.1} parent=11 // pred_region
          _
        $region16: #{tpu_custom_call.1} parent=11 // pred_fallthru
          _
        // Predicated region
        $region17: #{tpu_custom_call.1} parent=11 // pred_check
          %p280 = pneg %p174
        $region18: #{tpu_custom_call.1} parent=11 // pred_check_branch
          %282 = sbr.rel (%p280) target = $region20
        $region19: #{tpu_custom_call.1} parent=11 // pred_region
          _
        $region20: #{tpu_custom_call.1} parent=11 // pred_fallthru
          _
      $region12: #{tpu_custom_call.1} parent=5 // pred_fallthru
        _
      %p283 = scmp.lt.s32.totalorder %s23, 2
      // Predicated region
      $region21: #{tpu_custom_call.1} parent=5 // pred_check
        %p284 = pneg %p283
      $region22: #{tpu_custom_call.1} parent=5 // pred_check_branch
        %286 = sbr.rel (%p284) target = $region24
      $region23: #{tpu_custom_call.1} parent=5 // pred_region
        // Predicated region
        $region25: #{tpu_custom_call.1} parent=23 // pred_check
          %p287 = pneg %p66
        $region26: #{tpu_custom_call.1} parent=23 // pred_check_branch
          %289 = sbr.rel (%p287) target = $region28
        $region27: #{tpu_custom_call.1} parent=23 // pred_region
          %s290 = sand.u32 %s56, 1
          %s291 = scalar_lea.sflag [#allocation5], %s290
          %s292 = sand.u32 %s56, 1
          %s293 = smul.addr %s292, 8
          %s294 = scalar_lea.vmem [#allocation4], %s293
          %s295 = sadd.s32 %s31, %s32
          %s296 = smul.u32 2, %s295
          %s298 = ssub.s32 128, 128
          %299 = vsyncadd %s291, %s298
          %s300 = smul.addr %s30, 2
          %s301 = sadd.s32 %s296, %s300
          %s302 = smul.addr %s301, 64
          %s303 = scalar_lea.hbm %s0, %s302
          %s305 = sshll.u32 %s294, 4
          %s306 = int_to_ptr.vmem [resolvable:$true] %s305
          %308 = dma.hbm_to_vmem [thread:$0]  %s303, 128, %s306, %s291
        $region28: #{tpu_custom_call.1} parent=23 // pred_fallthru
          _
        // Predicated region
        $region29: #{tpu_custom_call.1} parent=23 // pred_check
          %p309 = pneg %p96
        $region30: #{tpu_custom_call.1} parent=23 // pred_check_branch
          %311 = sbr.rel (%p309) target = $region32
        $region31: #{tpu_custom_call.1} parent=23 // pred_region
          %s312 = sadd.s32 %s31, %s32
          %s313 = smul.u32 2, %s312
          %p314 = scmp.lt.s32.totalorder %s30, 1
          %s315 = scalar_select %p314, %s30, 1
          %p316 = scmp.lt.s32.totalorder %s313, 1
          %s317 = scalar_select %p316, %s313, 1
          %s318 = smul.addr %s315, 2
          %s319 = sadd.s32 %s317, %s318
          %s320 = smul.addr %s319, 8
          %s321 = scalar_lea.vmem %s1, %s320
          %s322 = sadd.s32 %s31, %s32
          %s323 = smul.u32 2, %s322
        $region32: #{tpu_custom_call.1} parent=23 // pred_fallthru
          _
        // Predicated region
        $region33: #{tpu_custom_call.1} parent=23 // pred_check
          %p324 = pneg %p126
        $region34: #{tpu_custom_call.1} parent=23 // pred_check_branch
          %326 = sbr.rel (%p324) target = $region36
        $region35: #{tpu_custom_call.1} parent=23 // pred_region
          %s327 = sadd.s32 %s31, %s32
          %s328 = smul.u32 2, %s327
          %p329 = scmp.lt.s32.totalorder %s30, 1
          %s330 = scalar_select %p329, %s30, 1
          %p331 = scmp.lt.s32.totalorder %s328, 1
          %s332 = scalar_select %p331, %s328, 1
          %s333 = smul.addr %s330, 2
          %s334 = sadd.s32 %s332, %s333
          %s335 = scalar_lea.vmem %s2, %s334
          %s336 = sadd.s32 %s31, %s32
          %s337 = smul.u32 2, %s336
        $region36: #{tpu_custom_call.1} parent=23 // pred_fallthru
          _
      $region24: #{tpu_custom_call.1} parent=5 // pred_fallthru
        _
      %p338 = scmp.le.s32.totalorder 1, %s23
      %p339 = scmp.lt.s32.totalorder %s23, 3
      %p340 = pnand %p338, %p339
      %p341 = pneg %p340
      // Predicated region
      $region37: #{tpu_custom_call.1} parent=5 // pred_check
        _
      $region38: #{tpu_custom_call.1} parent=5 // pred_check_branch
        %343 = sbr.rel (%p340) target = $region40
      $region39: #{tpu_custom_call.1} parent=5 // pred_region
        %s344 = ssub.s32 %s23, 1
        %s345 = sand.u32 %s59, 1
        %s346 = scalar_lea.sflag [#allocation5], %s345
        %s347 = sand.u32 %s59, 1
        %s348 = smul.addr %s347, 8
        %s349 = scalar_lea.vmem [#allocation4], %s348
        // Predicated region
        $region41: #{tpu_custom_call.1} parent=39 // pred_check
          %p350 = pneg %p72
        $region42: #{tpu_custom_call.1} parent=39 // pred_check_branch
          %352 = sbr.rel (%p350) target = $region44
        $region43: #{tpu_custom_call.1} parent=39 // pred_region
          %353 = dma.done %s346, 128
        $region44: #{tpu_custom_call.1} parent=39 // pred_fallthru
          _
        %s354 = sand.u32 %s59, 1
        %s355 = scalar_lea.sflag [#allocation5], %s354
        %s356 = sand.u32 %s59, 1
        %s357 = smul.addr %s356, 8
        %s358 = scalar_lea.vmem [#allocation4], %s357
        %p359 = pneg %p72
        %p360 = pneg %p69
        %s361 = sadd.s32 %s34, %s35
        %s362 = smul.u32 2, %s361
        %p363 = scmp.lt.s32.totalorder %s33, 1
        %s364 = scalar_select %p363, %s33, 1
        %p365 = scmp.lt.s32.totalorder %s362, 1
        %s366 = scalar_select %p365, %s362, 1
        %s367 = smul.addr %s364, 2
        %s368 = sadd.s32 %s366, %s367
        %s369 = smul.addr %s368, 8
        %s370 = scalar_lea.vmem %s1, %s369
        %p371 = pneg %p102
        %p372 = pneg %p99
        %s373 = sadd.s32 %s34, %s35
        %s374 = smul.u32 2, %s373
        %p375 = scmp.lt.s32.totalorder %s33, 1
        %s376 = scalar_select %p375, %s33, 1
        %p377 = scmp.lt.s32.totalorder %s374, 1
        %s378 = scalar_select %p377, %s374, 1
        %s379 = smul.addr %s376, 2
        %s380 = sadd.s32 %s378, %s379
        %s381 = scalar_lea.vmem %s2, %s380
        %p382 = pneg %p132
        %p383 = pneg %p129
        %p384 = pneg %p153
        %p385 = pneg %p150
        %p386 = pneg %p174
        %p387 = pneg %p171
        %p388 = pneg %p204
        %p389 = pneg %p201
        %s390 = sand.u32 %s191, 1
        %s391 = scalar_lea.sflag [#allocation6], %s390
        %s392 = sand.u32 %s191, 1
        %s393 = smul.addr %s392, 16
        %s394 = scalar_lea.vmem [#allocation7], %s393
        %p395 = pneg %p234
        %p396 = pneg %p231
        %s397 = sand.u32 %s28, 1
        %s398 = scalar_lea.sflag [#allocation9], %s397
        %s399 = sand.u32 %s221, 1
        %s400 = smul.addr %s399, 4
        %s401 = scalar_lea.vmem [#allocation8], %s400
        %p402 = pneg %p262
        %p403 = pneg %p259
        %s404 = sand.u32 %s28, 1
        %s405 = scalar_lea.sflag [#allocation9], %s404
        %s406 = sand.u32 %s249, 1
        %s407 = scalar_lea.vmem [#allocation10], %s406
        %s408 = sadd.s32 %s34, %s35
        %s409 = smul.u32 2, %s408
        %s410 = sadd.s32 %s34, %s35
        %s411 = smul.u32 2, %s410
        %p412 = scmp.lt.s32.totalorder %s33, 1
        %s413 = scalar_select %p412, %s33, 1
        %p414 = scmp.lt.s32.totalorder %s411, 1
        %s415 = scalar_select %p414, %s411, 1
        %s416 = smul.addr %s413, 2
        %s417 = sadd.s32 %s415, %s416
        %s418 = smul.addr %s417, 8
        %s419 = scalar_lea.vmem %s1, %s418
        %s420 = sadd.s32 %s34, %s35
        %s421 = smul.u32 2, %s420
        %s422 = sadd.s32 %s34, %s35
        %s423 = smul.u32 2, %s422
        %p424 = scmp.lt.s32.totalorder %s33, 1
        %s425 = scalar_select %p424, %s33, 1
        %p426 = scmp.lt.s32.totalorder %s423, 1
        %s427 = scalar_select %p426, %s423, 1
        %s428 = smul.addr %s425, 2
        %s429 = sadd.s32 %s427, %s428
        %s430 = scalar_lea.vmem %s2, %s429
        %s431 = sadd.s32 %s34, %s35
        %s432 = smul.u32 2, %s431
        %s433 = sadd.s32 %s34, %s35
        %s434 = smul.u32 2, %s433
        %s435 = sadd.s32 %s34, %s35
        %s436 = smul.u32 2, %s435
        %v437 = vld [vmem:[%s3] sm:$0xff]
        %v438 = vld [vmem:[%s3 + $0x8] sm:$0x3]
        %v439 = vld [vmem:[%s349] sm:$0xff]
        %v440 = vld [vmem:[%s4] sm:$0xff]
        %v441 = vld [vmem:[%s4 + $0x8] sm:$0x3]
        %443 = vset.pattern.permute.xlu0 0
        %444 = vperm.xlu0 %443, %v440
        %v445 = vpop.permute.xlu0 %444
        %448 = vset.pattern.permute.xlu0 0
        %449 = vperm.xlu0 %448, %v441
        %v450 = vpop.permute.xlu0 %449
        %v453 = vcombine.high %v439, %v439
        %vm454 = vcmask 31744
        %v456 = vsel %vm454, %v437, 0
        %v459 = vsel %vm454, %v438, 0
        %vm461 = vcmask 1043456
        %v462 = vsel %vm461, %v439, 0
        %v464 = vsel %vm461, %v453, 0
        %466 = vmatprep.subr.mxu0 %v464
        %467 = vmatpush1.msra.mxu0 %v462
        %468 = vmatprep.subr.mxu0 0.0
        %469 = vmatpush1.msra.mxu0 0.0
        %470 = vmatprep.subr.mxu0 0.0
        %471 = vmatpush1.msra.mxu0 0.0
        %472 = vmatprep.subr.mxu0 0.0
        %473 = vmatpush1.msra.mxu0 0.0
        %474 = vmatprep.subr.mxu0 0.0
        %475 = vmatpush1.msra.mxu0 0.0
        %476 = vmatprep.subr.mxu0 0.0
        %477 = vmatpush1.msra.mxu0 0.0
        %478 = vmatprep.subr.mxu0 0.0
        %479 = vmatpush1.msra.mxu0 0.0
        %480 = vmatprep.subr.mxu0 0.0
        %481 = vmatpush1.msra.mxu0 0.0
        %482 = vmatprep.subr.mxu0 0.0
        %483 = vmatpush1.msra.mxu0 0.0
        %484 = vmatprep.subr.mxu0 0.0
        %485 = vmatpush1.msra.mxu0 0.0
        %486 = vmatprep.subr.mxu0 0.0
        %487 = vmatpush1.msra.mxu0 0.0
        %488 = vmatprep.subr.mxu0 0.0
        %489 = vmatpush1.msra.mxu0 0.0
        %490 = vmatprep.subr.mxu0 0.0
        %491 = vmatpush1.msra.mxu0 0.0
        %492 = vmatprep.subr.mxu0 0.0
        %493 = vmatpush1.msra.mxu0 0.0
        %494 = vmatprep.subr.mxu0 0.0
        %495 = vmatpush1.msra.mxu0 0.0
        %496 = vmatprep.subr.mxu0 0.0
        %497 = vmatpush1.msra.mxu0 0.0
        %498 = vmatprep.subr.mxu0 0.0
        %499 = vmatpush1.msra.mxu0 0.0
        %500 = vmatprep.subr.mxu0 0.0
        %501 = vmatpush1.msra.mxu0 0.0
        %502 = vmatprep.subr.mxu0 0.0
        %503 = vmatpush1.msra.mxu0 0.0
        %504 = vmatprep.subr.mxu0 0.0
        %505 = vmatpush1.msra.mxu0 0.0
        %506 = vmatprep.subr.mxu0 0.0
        %507 = vmatpush1.msra.mxu0 0.0
        %508 = vmatprep.subr.mxu0 0.0
        %509 = vmatpush1.msra.mxu0 0.0
        %510 = vmatprep.subr.mxu0 0.0
        %511 = vmatpush1.msra.mxu0 0.0
        %512 = vmatprep.subr.mxu0 0.0
        %513 = vmatpush1.msra.mxu0 0.0
        %514 = vmatprep.subr.mxu0 0.0
        %515 = vmatpush1.msra.mxu0 0.0
        %516 = vmatprep.subr.mxu0 0.0
        %517 = vmatpush1.msra.mxu0 0.0
        %518 = vmatprep.subr.mxu0 0.0
        %519 = vmatpush1.msra.mxu0 0.0
        %520 = vmatprep.subr.mxu0 0.0
        %521 = vmatpush1.msra.mxu0 0.0
        %522 = vmatprep.subr.mxu0 0.0
        %523 = vmatpush1.msra.mxu0 0.0
        %524 = vmatprep.subr.mxu0 0.0
        %525 = vmatpush1.msra.mxu0 0.0
        %526 = vmatprep.subr.mxu0 0.0
        %527 = vmatpush1.msra.mxu0 0.0
        %528 = vmatprep.subr.mxu0 0.0
        %529 = vmatpush1.msra.mxu0 0.0
        %530 = vmatprep.mubr.f32.mxu0 0.0
        %531 = vmatmul.mubr.f32.gmra.mrb[0].mxu0 %v456
        %v532 = vpop.f32.mrb[0].mxu0
        %v533 = vadd.f32 %v445, %v532
        %v534 = vpop.f32.mrb[0].mxu0
        %v535 = vadd.f32 %v445, %v534
        %536 = vmatprep.mubr.f32.mxu0 0.0
        %537 = vmatmul.mubr.f32.gmra.mrb[0].mxu0 %v459
        %v538 = vpop.f32.mrb[0].mxu0
        %v539 = vadd.f32 %v450, %v538
        %v540 = vpop.f32.mrb[0].mxu0
        %v541 = vadd.f32 %v450, %v540
        %542 = vdwg.mxu0
        %543 = vst [vmem:[%s394] sm:$0xff] %v533
        %544 = vst [vmem:[%s394 + $0x8] sm:$0xff] %v535
        %v547 = vcombine.low %v539, %v541
        %v549 = vunpack.c.l.s4 1983009808
        %v550 = vunpack.c.0.s8 %v549
        %v551 = vlaneseq
        %v552 = vshrl.u32 %v551, 7
        %v553 = vsub.s32 %v550, %v552
        %v554 = vrot.slane %v547, %v553
        %556 = vst [vmem:[%s401] sm:$0xf] %v554
        %v557 = vld [vmem:[%s430] sm:$0x3]
        %v558 = vunpack.c.0.s8 %v557
        %v559 = vcvt.s32.f32 %v558
        %v560 = vld [vmem:[%s419] sm:$0xff]
        %v561 = vld [vmem:[%s419 + $0x8] sm:$0xff]
        %v562 = vsub.f32 %v533, %v560
        %v563 = vsub.f32 %v535, %v561
        %v565 = vlaneseq
        %v566 = vshrl.u32 %v565, 7
        %v567 = vsub.s32 0, %v566
        %v568 = vrot.slane %v559, %v567
        %v569 = vlaneseq
        %v570 = vshrl.u32 %v569, 7
        %v571 = vsub.s32 4, %v570
        %v572 = vrot.slane %v559, %v571
        %v575 = vlaneseq
        %v576 = vshrl.u32 %v575, 7
        %v577 = vsub.s32 0, %v576
        %v578 = vrot.slane %v568, %v577
        %v579 = vlaneseq
        %v580 = vshrl.u32 %v579, 7
        %v581 = vsub.s32 0, %v580
        %v582 = vrot.slane %v572, %v581
        %v583 = vmul.f32 %v562, %v578
        %v584 = vmul.f32 %v563, %v582
        %v585 = vand.u32 2147483647, %v583
        %v586 = vand.u32 2147483647, %v584
        %vm587 = vcmp.lt.f32.partialorder %v585, 1.0
        %vm588 = vcmp.lt.f32.partialorder %v586, 1.0
        %v589 = vmul.f32 %v583, 0.5
        %v590 = vmul.f32 %v584, 0.5
        %v591 = vmul.f32 %v589, %v583
        %v592 = vmul.f32 %v590, %v584
        %v593 = vsub.f32 %v585, 0.5
        %v594 = vsub.f32 %v586, 0.5
        %v595 = vsel %vm587, %v591, %v593
        %v596 = vsel %vm588, %v592, %v594
        %v597 = vrot.slane %v539, 1
        %v598 = vrot.slane %v541, 1
        %v601 = vmax.f32 %v539, %v597
        %v602 = vmax.f32 %v541, %v598
        %v603 = vsub.f32 %v539, %v597
        %v604 = vsub.f32 %v541, %v598
        %v605 = vand.u32 2147483647, %v603
        %v606 = vand.u32 2147483647, %v604
        %v607 = vsub.f32 0.0, %v605
        %v608 = vsub.f32 0.0, %v606
        %v609 = vmul.f32 %v607, 1.442695
        %v610 = vpow.pop %v609
        %v611 = vmul.f32 %v608, 1.442695
        %v612 = vpow.pop %v611
        %v613 = vadd.f32 %v610, 1.0
        %v614 = vadd.f32 %v612, 1.0
        %v615 = vlog2.pop %v613
        %v616 = vmul.f32 %v615, 0.6931472
        %v617 = vlog2.pop %v614
        %v618 = vmul.f32 %v617, 0.6931472
        %v619 = vadd.f32 %v601, %v616
        %v620 = vadd.f32 %v602, %v618
        %vm621 = vcmp.gt.f32.partialorder %v559, 0.5
        %v622 = vrot.slane %v547, 5
        %v623 = vrot.slane %v622, 4
        %v626 = vsel %vm621, %v623, %v547
        %v628 = vlaneseq
        %v629 = vshrl.u32 %v628, 7
        %v630 = vsub.s32 0, %v629
        %v631 = vrot.slane %v626, %v630
        %v632 = vlaneseq
        %v633 = vshrl.u32 %v632, 7
        %v634 = vsub.s32 4, %v633
        %v635 = vrot.slane %v626, %v634
        %v638 = vsub.f32 %v619, %v631
        %v639 = vsub.f32 %v620, %v635
        %p640 = scmp.eq.s32.totalorder %s35, 0
        // Predicated region
        $region45: #{tpu_custom_call.1} parent=39 // pred_check
          %p641 = pneg %p640
        $region46: #{tpu_custom_call.1} parent=39 // pred_check_branch
          %643 = sbr.rel (%p641) target = $region48
        $region47: #{tpu_custom_call.1} parent=39 // pred_region
          %644 = vst [vmem:[#allocation2] sm:$0xff] 0.0
          %645 = vst [vmem:[#allocation2 + $0x8] sm:$0xff] 0.0
          %646 = vst [vmem:[#allocation3] sm:$0xf] 0.0
        $region48: #{tpu_custom_call.1} parent=39 // pred_fallthru
          _
        %v647 = vld [vmem:[#allocation2] sm:$0xff]
        %v648 = vld [vmem:[#allocation2 + $0x8] sm:$0xff]
        %v649 = vadd.f32 %v647, %v595
        %v650 = vadd.f32 %v648, %v596
        %651 = vst [vmem:[#allocation2] sm:$0xff] %v649
        %652 = vst [vmem:[#allocation2 + $0x8] sm:$0xff] %v650
        %v653 = vld [vmem:[#allocation3] ss:$2 sm:$0x3]
        %v655 = vunpack.c.l.s4 1966171168
        %v656 = vunpack.c.0.s8 %v655
        %v657 = vlaneseq
        %v658 = vshrl.u32 %v657, 7
        %v659 = vsub.s32 %v656, %v658
        %v660 = vrot.slane %v559, %v659
        %v662 = vunpack.c.l.s4 1966171168
        %v663 = vunpack.c.0.s8 %v662
        %v664 = vlaneseq
        %v665 = vshrl.u32 %v664, 7
        %v666 = vsub.s32 %v663, %v665
        %v667 = vrot.slane %v660, %v666
        %v669 = vadd.f32 %v653, %v667
        %v670 = vlaneseq
        %vm671 = vcmp.ge.s32.totalorder %v670, 0
        %vm672 = vcmp.lt.s32.totalorder %v670, 256
        %vm673 = vmand %vm671, %vm672
        %674 = vst.msk [vmem:[#allocation3] ss:$2 sm:$0x3] %vm673, %v669
        %s675 = scalar_lea.vmem [#allocation3], 1
        %v676 = vld [vmem:[%s675] ss:$2 sm:$0x3]
        %v679 = vcombine.low %v638, %v639
        %v681 = vunpack.c.l.s4 1966171168
        %v682 = vunpack.c.0.s8 %v681
        %v683 = vlaneseq
        %v684 = vshrl.u32 %v683, 7
        %v685 = vsub.s32 %v682, %v684
        %v686 = vrot.slane %v679, %v685
        %v688 = vunpack.c.l.s4 1966171168
        %v689 = vunpack.c.0.s8 %v688
        %v690 = vlaneseq
        %v691 = vshrl.u32 %v690, 7
        %v692 = vsub.s32 %v689, %v691
        %v693 = vrot.slane %v686, %v692
        %v695 = vadd.f32 %v676, %v693
        %696 = vst.msk [vmem:[%s675] ss:$2 sm:$0x3] %vm673, %v695
        // Predicated region
        $region49: #{tpu_custom_call.1} parent=39 // pred_check
          %p697 = pneg %p640
        $region50: #{tpu_custom_call.1} parent=39 // pred_check_branch
          %699 = sbr.rel (%p697) target = $region52
        $region51: #{tpu_custom_call.1} parent=39 // pred_region
          %v700 = vld [vmem:[#allocation2] sm:$0xff]
          %v701 = vld [vmem:[#allocation2 + $0x8] sm:$0xff]
          %v702 = vadd.f32 %v700, %v701
          %703 = vadd.xlane.f32.xlu0 %v702
          %v704 = vpop.xlane.xlu0 %703
          %v705 = vrot.slane %v704, 4
          %v706 = vadd.f32 %v704, %v705
          %v707 = vrot.slane %v706, 2
          %v708 = vadd.f32 %v706, %v707
          %v709 = vrot.slane %v708, 1
          %v710 = vadd.f32 %v708, %v709
          %s711 = vtos %v710
          %v712 = vld [vmem:[#allocation3] ss:$2 sm:$0x3]
          %v714 = vlaneseq
          %v715 = vshrl.u32 %v714, 7
          %v716 = vsub.s32 0, %v715
          %v717 = vrot.slane %v712, %v716
          %v718 = vlaneseq
          %v719 = vshrl.u32 %v718, 7
          %v720 = vsub.s32 1, %v719
          %v721 = vrot.slane %v712, %v720
          %vm724 = vcmask 1040384
          %v725 = vsel %vm724, %v717, 0.0
          %v726 = vsel %vm724, %v721, 0.0
          %v727 = vadd.f32 %v725, %v726
          %728 = vadd.xlane.f32.xlu0 %v727
          %v729 = vpop.xlane.xlu0 %728
          %v730 = vrot.slane %v729, 4
          %v731 = vadd.f32 %v729, %v730
          %v732 = vrot.slane %v731, 2
          %v733 = vadd.f32 %v731, %v732
          %v734 = vrot.slane %v733, 1
          %v735 = vadd.f32 %v733, %v734
          %s736 = vtos %v735
          %v737 = vld [vmem:[%s675] ss:$2 sm:$0x3]
          %v739 = vlaneseq
          %v740 = vshrl.u32 %v739, 7
          %v741 = vsub.s32 0, %v740
          %v742 = vrot.slane %v737, %v741
          %v743 = vlaneseq
          %v744 = vshrl.u32 %v743, 7
          %v745 = vsub.s32 1, %v744
          %v746 = vrot.slane %v737, %v745
          %v749 = vsel %vm724, %v742, 0.0
          %v750 = vsel %vm724, %v746, 0.0
          %v751 = vadd.f32 %v749, %v750
          %752 = vadd.xlane.f32.xlu0 %v751
          %v753 = vpop.xlane.xlu0 %752
          %v754 = vrot.slane %v753, 4
          %v755 = vadd.f32 %v753, %v754
          %v756 = vrot.slane %v755, 2
          %v757 = vadd.f32 %v755, %v756
          %v758 = vrot.slane %v757, 1
          %v759 = vadd.f32 %v757, %v758
          %s760 = vtos %v759
          %v761 = vlaneseq
          %v762 = vand.u32 %v761, 127
          %vm763 = vcmp.eq.s32.totalorder %v762, 0
          %vm764 = vcmp.eq.s32.totalorder %v762, 1
          %v765 = vstv %s736
          %v766 = vstv %s760
          %v767 = vsel %vm764, %v765, %v766
          %v768 = vstv %s711
          %v769 = vsel %vm763, %v768, %v767
          %vm770 = vcmask 16384
          %771 = vst.msk [vmem:[%s407] sm:$0x1] %vm770, %v769
        $region52: #{tpu_custom_call.1} parent=39 // pred_fallthru
          _
        %s772 = sand.u32 %s191, 1
        %s773 = scalar_lea.sflag [#allocation6], %s772
        %s774 = sand.u32 %s191, 1
        %s775 = smul.addr %s774, 16
        %s776 = scalar_lea.vmem [#allocation7], %s775
        %s777 = sand.u32 %s28, 1
        %s778 = scalar_lea.sflag [#allocation9], %s777
        %s779 = sand.u32 %s221, 1
        %s780 = smul.addr %s779, 4
        %s781 = scalar_lea.vmem [#allocation8], %s780
        %s782 = sand.u32 %s28, 1
        %s783 = scalar_lea.sflag [#allocation9], %s782
        %s784 = sand.u32 %s249, 1
        %s785 = scalar_lea.vmem [#allocation10], %s784
        // Predicated region
        $region53: #{tpu_custom_call.1} parent=39 // pred_check
          %p786 = pneg %p201
        $region54: #{tpu_custom_call.1} parent=39 // pred_check_branch
          %788 = sbr.rel (%p786) target = $region56
        $region55: #{tpu_custom_call.1} parent=39 // pred_region
          %s789 = sadd.s32 %s34, %s35
          %s790 = smul.u32 2, %s789
          %s792 = ssub.s32 256, 256
          %793 = vsyncadd %s773, %s792
          %s794 = smul.addr %s33, 2
          %s795 = sadd.s32 %s790, %s794
          %s796 = smul.addr %s795, 128
          %s797 = scalar_lea.hbm %s5, %s796
          %s799 = sshll.u32 %s776, 4
          %s800 = int_to_ptr.vmem [resolvable:$true] %s799
          %802 = dma.vmem_to_hbm [thread:$0]  %s800, 256, %s797, %s773
        $region56: #{tpu_custom_call.1} parent=39 // pred_fallthru
          _
        // Predicated region
        $region57: #{tpu_custom_call.1} parent=39 // pred_check
          %p803 = pneg %p231
        $region58: #{tpu_custom_call.1} parent=39 // pred_check_branch
          %805 = sbr.rel (%p803) target = $region60
        $region59: #{tpu_custom_call.1} parent=39 // pred_region
          %s806 = sadd.s32 %s34, %s35
          %s807 = smul.u32 2, %s806
          %s809 = ssub.s32 64, 64
          %810 = vsyncadd %s778, %s809
          %s811 = smul.addr %s33, 2
          %s812 = sadd.s32 %s807, %s811
          %s813 = smul.addr %s812, 32
          %s814 = scalar_lea.hbm %s6, %s813
          %s816 = sshll.u32 %s781, 4
          %s817 = int_to_ptr.vmem [resolvable:$true] %s816
          %819 = dma.vmem_to_hbm [thread:$0]  %s817, 64, %s814, %s778
        $region60: #{tpu_custom_call.1} parent=39 // pred_fallthru
          _
        // Predicated region
        $region61: #{tpu_custom_call.1} parent=39 // pred_check
          %p820 = pneg %p259
        $region62: #{tpu_custom_call.1} parent=39 // pred_check_branch
          %822 = sbr.rel (%p820) target = $region64
        $region63: #{tpu_custom_call.1} parent=39 // pred_region
          %s824 = ssub.s32 16, 16
          %825 = vsyncadd %s783, %s824
          %s826 = sadd.s32 %s34, %s33
          %s827 = smul.addr %s826, 16
          %s828 = scalar_lea.hbm %s7, %s827
          %s830 = sshll.u32 %s785, 4
          %s831 = int_to_ptr.vmem [resolvable:$true] %s830
          %833 = dma.vmem_to_hbm [thread:$0]  %s831, 16, %s828, %s783
        $region64: #{tpu_custom_call.1} parent=39 // pred_fallthru
          _
      $region40: #{tpu_custom_call.1} parent=5 // pred_fallthru
        _
      %p834 = scmp.le.s32.totalorder 2, %s23
      // Predicated region
      $region65: #{tpu_custom_call.1} parent=5 // pred_check
        %p835 = pneg %p834
      $region66: #{tpu_custom_call.1} parent=5 // pred_check_branch
        %837 = sbr.rel (%p835) target = $region68
      $region67: #{tpu_custom_call.1} parent=5 // pred_region
        %s838 = ssub.s32 %s23, 2
        // Predicated region
        $region69: #{tpu_custom_call.1} parent=67 // pred_check
          %p839 = pneg %p207
        $region70: #{tpu_custom_call.1} parent=67 // pred_check_branch
          %841 = sbr.rel (%p839) target = $region72
        $region71: #{tpu_custom_call.1} parent=67 // pred_region
          %s842 = sand.u32 %s192, 1
          %s843 = scalar_lea.sflag [#allocation6], %s842
          %s844 = sand.u32 %s192, 1
          %s845 = smul.addr %s844, 16
          %s846 = scalar_lea.vmem [#allocation7], %s845
          %847 = dma.done %s843, 256
        $region72: #{tpu_custom_call.1} parent=67 // pred_fallthru
          _
        // Predicated region
        $region73: #{tpu_custom_call.1} parent=67 // pred_check
          %p848 = pneg %p237
        $region74: #{tpu_custom_call.1} parent=67 // pred_check_branch
          %850 = sbr.rel (%p848) target = $region76
        $region75: #{tpu_custom_call.1} parent=67 // pred_region
          %s851 = sand.u32 %s29, 1
          %s852 = scalar_lea.sflag [#allocation9], %s851
          %s853 = sand.u32 %s222, 1
          %s854 = smul.addr %s853, 4
          %s855 = scalar_lea.vmem [#allocation8], %s854
          %856 = dma.done %s852, 64
        $region76: #{tpu_custom_call.1} parent=67 // pred_fallthru
          _
        // Predicated region
        $region77: #{tpu_custom_call.1} parent=67 // pred_check
          %p857 = pneg %p265
        $region78: #{tpu_custom_call.1} parent=67 // pred_check_branch
          %859 = sbr.rel (%p857) target = $region80
        $region79: #{tpu_custom_call.1} parent=67 // pred_region
          %s860 = sand.u32 %s29, 1
          %s861 = scalar_lea.sflag [#allocation9], %s860
          %s862 = sand.u32 %s250, 1
          %s863 = scalar_lea.vmem [#allocation10], %s862
          %864 = dma.done %s861, 16
        $region80: #{tpu_custom_call.1} parent=67 // pred_fallthru
          _
      $region68: #{tpu_custom_call.1} parent=5 // pred_fallthru
        _
    $region6: #{tpu_custom_call.1} parent=1 // loop_footer
      %s27 = sadd.s32 1, %s23
    $region7: #{tpu_custom_call.1} parent=1 // loop_footer_branch
      %22 = sbr.rel target = $region3
    $region8: #{tpu_custom_call.1} parent=1 // loop_exit
      _
    %865 = vsyncpa [#allocation5], 1
    %s866 = scalar_lea.sflag [#allocation5], 1
    %867 = vsyncpa %s866, 1
    %868 = vsyncpa [#allocation6], 1
    %s869 = scalar_lea.sflag [#allocation6], 1
    %870 = vsyncpa %s869, 1
    %871 = vsyncpa [#allocation9], 1
    %s872 = scalar_lea.sflag [#allocation9], 1
    %873 = vsyncpa %s872, 1

</llo_original>
